<compile_context>
chip_gen: v7x
topology: tpu7x:2x2x1
jax: 0.10.0
libtpu: 0.0.40
codegen_flags: <defaults>
</compile_context>

<pallas_src>
import functools

import jax
import jax.numpy as jnp
from jax.experimental import pallas as pl
from jax.experimental.pallas import tpu as pltpu


_TARGET_BLOCK_BYTES = 2 * 1024 * 1024  # ~2 MiB f32 per block; (in+out) x 2 bufs = 8 MiB
                                       # -> safe under default scoped VMEM on v5e/v6e/v7x.


def _quant_relu_kernel(x_ref, o_ref, *, inv_scale, inv_step, scale_step, scale,
                       min_q, max_q):
    x = x_ref[...].astype(jnp.float32)
    # HardTanh clamp to [-1, 1 - 2/2^b]  (multiply by reciprocal, no real division)
    z = jnp.clip(x * inv_scale - 1.0, min_q, max_q)
    # quantize to bit_width levels, rescale + shift -> [0, max_val]
    q = jnp.round(z * inv_step)
    o_ref[...] = (q * scale_step + scale).astype(o_ref.dtype)


def _choose_layout(n_padded):
    """Pick a lane-dense 2-D (rows, width) view and a ~2 MiB block row count."""
    width = 128
    for w in (2048, 1024, 512, 256):
        if n_padded % w == 0:
            width = w
            break
    rows = n_padded // width
    target_rows = max(8, (_TARGET_BLOCK_BYTES // (width * 4)) // 8 * 8)
    block_rows = rows if rows <= target_rows else target_rows
    return width, rows, block_rows


@functools.partial(jax.jit, static_argnames=("max_val", "bit_width"))
def my_quant_relu(x, *, max_val=6.0, bit_width=4):
    """Pallas implementation of MyQuantReLU.forward.  x: any-shape float array (NCHW)."""
    min_val_act = -1.0
    max_val_act = 1.0 - 2.0 / (2 ** bit_width)
    step = 2.0 / (2 ** bit_width)
    scale = (max_val - 0.0) / (max_val_act - min_val_act)

    # Precomputed constants (strength-reduce divisions, fold the rescale chain).
    inv_scale = 1.0 / scale
    inv_step = float(2 ** (bit_width - 1))      # 1/step  (exact, power of two)
    scale_step = scale * step

    orig_shape = x.shape
    orig_dtype = x.dtype

    flat = x.reshape(-1)
    n = flat.shape[0]

    # Pad only when unavoidable (n not a multiple of 128); common conv-activation
    # sizes hit the pad-free path, avoiding extra HBM passes.
    pad = (-n) % 128
    if pad:
        flat = jnp.pad(flat, (0, pad))
    n_padded = n + pad

    width, rows, block_rows = _choose_layout(n_padded)
    x2d = flat.reshape(rows, width)             # lane-dense 2-D view
    num_blocks = pl.cdiv(rows, block_rows)

    kernel = functools.partial(
        _quant_relu_kernel,
        inv_scale=inv_scale,
        inv_step=inv_step,
        scale_step=scale_step,
        scale=scale,
        min_q=min_val_act,
        max_q=max_val_act,
    )

    out2d = pl.pallas_call(
        kernel,
        out_shape=jax.ShapeDtypeStruct((rows, width), orig_dtype),
        grid=(num_blocks,),
        in_specs=[pl.BlockSpec((block_rows, width), lambda i: (i, 0))],
        out_specs=pl.BlockSpec((block_rows, width), lambda i: (i, 0)),
        compiler_params=pltpu.CompilerParams(
            dimension_semantics=("parallel",)),
    )(x2d)

    out_flat = out2d.reshape(-1)
    if pad:
        out_flat = out_flat[:n]
    return out_flat.reshape(orig_shape)


def _ref_quant_relu(x, *, max_val=6.0, bit_width=4):
    """Pure-JAX reference of the same math (for a correctness check)."""
    min_val_act = -1.0
    max_val_act = 1.0 - 2.0 / (2 ** bit_width)
    step = 2.0 / (2 ** bit_width)
    scale = (max_val - 0.0) / (max_val_act - min_val_act)
    z = jnp.clip(x.astype(jnp.float32) / scale - 1.0, min_val_act, max_val_act)
    zq = jnp.round(z / step) * step
    return (scale * zq + scale).astype(x.dtype)


if __name__ == "__main__":
    key = jax.random.PRNGKey(0)
    # Small NCHW activation tensor, consistent with a conv-net activation.
    x = jax.random.normal(key, (2, 4, 16, 16), dtype=jnp.float32) * 4.0

    out = my_quant_relu(x, max_val=6.0, bit_width=4)
    out = jax.block_until_ready(out)

    ref = _ref_quant_relu(x, max_val=6.0, bit_width=4)
    assert out.shape == x.shape and out.dtype == x.dtype
    assert jnp.allclose(out, ref, atol=1e-5), "mismatch vs reference"

    # Also exercise a non-multiple-of-128 (padded) path and a multi-block path.
    x2 = jax.random.normal(jax.random.PRNGKey(1), (3, 5, 7, 11), dtype=jnp.float32) * 4.0
    out2 = jax.block_until_ready(my_quant_relu(x2, max_val=6.0, bit_width=4))
    assert jnp.allclose(out2, _ref_quant_relu(x2, max_val=6.0, bit_width=4), atol=1e-5)

    print("KERNEL_OK")
</pallas_src>

<mosaic_0001>
module attributes {stable_mosaic.version = 11 : i64} {
  func.func @_quant_relu_kernel(%arg0: i32, %arg1: memref<1x2048xf32, #tpu.memory_space<vmem>>, %arg2: memref<1x2048xf32, #tpu.memory_space<vmem>>) attributes {dimension_semantics = [#tpu.dimension_semantics<parallel>], iteration_bounds = array<i64: 1>, scalar_prefetch = 0 : i64, scratch_operands = 0 : i64, tpu.core_type = #tpu.core_type<tc>, window_params = [{transform_indices = @transform_0, window_bounds = array<i64: 1, 2048>}, {transform_indices = @transform_1, window_bounds = array<i64: 1, 2048>}]} {
    %c0 = arith.constant 0 : index
    %c0_0 = arith.constant 0 : index
    %0 = vector.load %arg1[%c0, %c0_0] : memref<1x2048xf32, #tpu.memory_space<vmem>>, vector<1x2048xf32>
    %cst = arith.constant 3.125000e-01 : f32
    %1 = vector.broadcast %cst : f32 to vector<1x2048xf32>
    %2 = arith.mulf %0, %1 : vector<1x2048xf32>
    %cst_1 = arith.constant 1.000000e+00 : f32
    %3 = vector.broadcast %cst_1 : f32 to vector<1x2048xf32>
    %4 = arith.subf %2, %3 : vector<1x2048xf32>
    %cst_2 = arith.constant -1.000000e+00 : f32
    %cst_3 = arith.constant 8.750000e-01 : f32
    %5 = vector.broadcast %cst_2 : f32 to vector<1x2048xf32>
    %6 = arith.maximumf %5, %4 : vector<1x2048xf32>
    %7 = vector.broadcast %cst_3 : f32 to vector<1x2048xf32>
    %8 = arith.minimumf %7, %6 : vector<1x2048xf32>
    %cst_4 = arith.constant 8.000000e+00 : f32
    %9 = vector.broadcast %cst_4 : f32 to vector<1x2048xf32>
    %10 = arith.mulf %8, %9 : vector<1x2048xf32>
    %11 = math.roundeven %10 : vector<1x2048xf32>
    %cst_5 = arith.constant 4.000000e-01 : f32
    %12 = vector.broadcast %cst_5 : f32 to vector<1x2048xf32>
    %13 = arith.mulf %11, %12 : vector<1x2048xf32>
    %cst_6 = arith.constant 3.200000e+00 : f32
    %14 = vector.broadcast %cst_6 : f32 to vector<1x2048xf32>
    %15 = arith.addf %13, %14 : vector<1x2048xf32>
    %c0_7 = arith.constant 0 : index
    %c0_8 = arith.constant 0 : index
    %16 = vector.load %arg2[%c0_7, %c0_8] : memref<1x2048xf32, #tpu.memory_space<vmem>>, vector<1x2048xf32>
    tpu.vector_store %arg2[%c0_7, %c0_8], %15 {strides = array<i32>} : memref<1x2048xf32, #tpu.memory_space<vmem>>, vector<1x2048xf32>,
    return
  }
  func.func @transform_0(%arg0: i32) -> (i32, i32) {
    %c0_i32 = arith.constant 0 : i32
    %c0_i32_0 = arith.constant 0 : i32
    return %arg0, %c0_i32 : i32, i32
  }
  func.func @transform_1(%arg0: i32) -> (i32, i32) {
    %c0_i32 = arith.constant 0 : i32
    %c0_i32_0 = arith.constant 0 : i32
    return %arg0, %c0_i32 : i32, i32
  }
}

</mosaic_0001>

<llo_original>
// kernel: my_quant_relu.1
$region0: #{my_quant_relu.1}
  #allocation0 [shape = 'u32[]', space=smem, size = 0x4, offset = 0x4, fixed_abs, tag = 'smem constant byte address 0x4 - core index']
  #allocation1 [shape = 'u32[144,128]{1,0:T(1,128)}', space=vmem, size = 0x12000, scoped, tag = 'internal scratch']
  %s0 = inlined_call_operand.vmem [shape: f32[1,2048], index: 0, kind: input, shape index: {}]
  %s1 = inlined_call_operand.vmem [shape: f32[1,2048], index: 1, kind: output, shape index: {}]
  %s2 = sld [smem:[#allocation0]]
  $region14: #{my_quant_relu.1} parent=0
    _
  %s4 = ssub.s32 1, %s2
  %s5 = scalar_select 0, %s4, %s2
  // Predicated region
  $region2: #{my_quant_relu.1} parent=0 // pred_check
    _
  $region3: #{my_quant_relu.1} parent=0 // pred_check_branch
    %7 = sbr.rel (0) target = $region5
  $region4: #{my_quant_relu.1} parent=0 // pred_region
    _
  $region5: #{my_quant_relu.1} parent=0 // pred_fallthru
    _
  %v8 = vld [vmem:[%s0] sm:$0xff]
  %v9 = vld [vmem:[%s0 + $0x8] sm:$0xff]
  %v10 = vmul.f32 %v8, 0.3125
  %v11 = vmul.f32 %v9, 0.3125
  %v12 = vsub.f32 %v10, 1.0
  %v13 = vsub.f32 %v11, 1.0
  %v14 = vmax.f32 %v12, -1.0
  %v15 = vmax.f32 %v13, -1.0
  %v16 = vmin.f32 %v14, 0.875
  %v17 = vmin.f32 %v15, 0.875
  %v18 = vmul.f32 %v16, 8.0
  %v19 = vmul.f32 %v17, 8.0
  %v20 = vround.ne.pseudo %v18
  %v21 = vround.ne.pseudo %v19
  %v22 = vmul.f32 %v20, 0.4
  %v23 = vmul.f32 %v21, 0.4
  %v24 = vadd.f32 %v22, 3.2
  %v25 = vadd.f32 %v23, 3.2
  %26 = vst [vmem:[%s1] sm:$0xff] %v24
  %27 = vst [vmem:[%s1 + $0x8] sm:$0xff] %v25
  // Predicated region
  $region6: #{my_quant_relu.1} parent=0 // pred_check
    _
  $region7: #{my_quant_relu.1} parent=0 // pred_check_branch
    %29 = sbr.rel (0) target = $region9
  $region8: #{my_quant_relu.1} parent=0 // pred_region
    _
  $region9: #{my_quant_relu.1} parent=0 // pred_fallthru
    _
  // Predicated region
  $region10: #{my_quant_relu.1} parent=0 // pred_check
    _
  $region11: #{my_quant_relu.1} parent=0 // pred_check_branch
    %31 = sbr.rel (0) target = $region13
  $region12: #{my_quant_relu.1} parent=0 // pred_region
    _
  $region13: #{my_quant_relu.1} parent=0 // pred_fallthru
    _

</llo_original>
